<compile_context>
chip_gen: v7x
topology: tpu7x:2x2x1
jax: 0.10.0
libtpu: 0.0.40
codegen_flags: <defaults>
</compile_context>

<pallas_src>
import jax
import jax.numpy as jnp
from jax import lax
from jax.experimental import pallas as pl
from jax.experimental.pallas import tpu as pltpu


def pam_kernel(alpha_ref, wb_ref, bb_ref, wc_ref, bc_ref, wd_ref, bd_ref,
               xfull_ref, xq_ref, o_ref, ckey_ref, dval_ref):
    # alpha: (1,) f32 in SMEM.  Weights: (C, C) bf16 (co, ci).  Biases: (C, 1) f32.
    # xfull_ref: (1, C, HW) full image (resident across the q axis).
    # xq_ref / o_ref: (1, C, TQ) query tile / output tile.
    # ckey_ref / dval_ref: (C, HW) bf16 VMEM scratch (per-image key/value proj).
    q = pl.program_id(1)

    # ---- once per image: key / value projections, kept resident as bf16 ----
    @pl.when(q == 0)
    def _():
        x_img = xfull_ref[0].astype(jnp.bfloat16)                       # (C, HW)
        ck = jnp.dot(wc_ref[...], x_img,
                     preferred_element_type=jnp.float32) + bc_ref[...]
        ckey_ref[...] = ck.astype(jnp.bfloat16)
        dv = jnp.dot(wd_ref[...], x_img,
                     preferred_element_type=jnp.float32) + bd_ref[...]
        dval_ref[...] = dv.astype(jnp.bfloat16)

    # ---- per query tile ----------------------------------------------------
    x_q = xq_ref[0]                                                     # (C, TQ)
    b_q = jnp.dot(wb_ref[...], x_q.astype(jnp.bfloat16),
                  preferred_element_type=jnp.float32) + bb_ref[...]     # (C, TQ)

    # scores: s[p, k] = sum_c B[c, p] * Ckey[c, k]  -> (TQ, HW)
    s = lax.dot_general(b_q.astype(jnp.bfloat16), ckey_ref[...],
                        (((0,), (0,)), ((), ())),
                        preferred_element_type=jnp.float32)

    # numerically stable softmax over the key axis
    s = s - jnp.max(s, axis=-1, keepdims=True)
    p = jnp.exp(s)
    attn = p * pl.reciprocal(jnp.sum(p, axis=-1, keepdims=True), approx=True)

    # y[c, p] = sum_k D[c, k] * attn[p, k]  -> (C, TQ)  (lane-dense output)
    y = lax.dot_general(dval_ref[...], attn.astype(jnp.bfloat16),
                        (((1,), (1,)), ((), ())),
                        preferred_element_type=jnp.float32)

    # residual with learnable scale
    o_ref[0] = (alpha_ref[0] * y + x_q).astype(o_ref.dtype)


def _pick_tq(hw):
    """Largest query tile (multiple of 128, divides HW) whose live (TQ, HW)
    softmax intermediates stay well under v7x's 64 MiB VMEM."""
    if hw % 128 != 0:
        return hw
    budget = 24 << 20          # ~3 live (TQ, HW) f32 intermediates
    best = 128
    for cand in (128, 256, 512, 1024):
        if hw % cand == 0 and 3 * cand * hw * 4 <= budget:
            best = cand
    return best


def pam_forward(x_nchw, alpha, wb, bb, wc, bc, wd, bd, *, tq=None):
    n, c, h, w = x_nchw.shape
    hw = h * w

    # Pad channels to a multiple of 16 so all MXU operands are layout aligned.
    # Zero padding is exact: padded channels of B/C/D are identically zero and
    # contribute nothing to the scores; padded output rows are sliced off.
    c_pad = max(16, -(-c // 16) * 16)
    pc = c_pad - c

    # NCHW -> (N, C, HW): pure reshape, no HBM transpose pass.
    x_flat = x_nchw.reshape(n, c, hw)
    if pc:
        x_flat = jnp.pad(x_flat, ((0, 0), (0, pc), (0, 0)))

    def prep_w(wmat):
        wm = wmat.reshape(c, c)                       # (co, ci)
        if pc:
            wm = jnp.pad(wm, ((0, pc), (0, pc)))
        return wm.astype(jnp.bfloat16)

    def prep_b(bvec):
        bv = bvec.reshape(c, 1).astype(jnp.float32)
        if pc:
            bv = jnp.pad(bv, ((0, pc), (0, 0)))
        return bv

    wb2, wc2, wd2 = prep_w(wb), prep_w(wc), prep_w(wd)
    bb2, bc2, bd2 = prep_b(bb), prep_b(bc), prep_b(bd)

    if tq is None:
        tq = _pick_tq(hw)
    if hw % tq != 0 or (tq % 128 != 0 and tq != hw):
        tq = hw
    n_q = hw // tq

    # Explicit VMEM budget (review: set vmem_limit_bytes, leave v7x headroom).
    est = (2 * c_pad * hw * 4                       # x full image (double-buffered)
           + 4 * c_pad * tq * 4                     # x query tile + out tile
           + 2 * 3 * (c_pad * c_pad * 2 + c_pad * 4)  # bf16 weights + f32 biases
           + 2 * c_pad * hw * 2                     # resident bf16 key/value proj
           + 4 * tq * hw * 4)                       # score / softmax intermediates
    vmem_limit = int(min(100 * (1 << 20), max(32 * (1 << 20), 2 * est)))

    cost = pl.CostEstimate(
        flops=int(n * (6 * c_pad * c_pad * hw + 4 * c_pad * hw * hw)),
        transcendentals=int(n * hw * hw),
        bytes_accessed=int(3 * n * c_pad * hw * 4
                           + 3 * (c_pad * c_pad * 2 + c_pad * 4)),
    )

    out_flat = pl.pallas_call(
        pam_kernel,
        out_shape=jax.ShapeDtypeStruct((n, c_pad, hw), x_nchw.dtype),
        grid=(n, n_q),
        in_specs=[
            pl.BlockSpec(memory_space=pltpu.MemorySpace.SMEM),      # alpha
            pl.BlockSpec((c_pad, c_pad), lambda i, j: (0, 0)),      # Wb
            pl.BlockSpec((c_pad, 1), lambda i, j: (0, 0)),          # bb
            pl.BlockSpec((c_pad, c_pad), lambda i, j: (0, 0)),      # Wc
            pl.BlockSpec((c_pad, 1), lambda i, j: (0, 0)),          # bc
            pl.BlockSpec((c_pad, c_pad), lambda i, j: (0, 0)),      # Wd
            pl.BlockSpec((c_pad, 1), lambda i, j: (0, 0)),          # bd
            pl.BlockSpec((1, c_pad, hw), lambda i, j: (i, 0, 0)),   # x (full image)
            pl.BlockSpec((1, c_pad, tq), lambda i, j: (i, 0, j)),   # x (query tile)
        ],
        out_specs=pl.BlockSpec((1, c_pad, tq), lambda i, j: (i, 0, j)),
        scratch_shapes=[
            pltpu.VMEM((c_pad, hw), jnp.bfloat16),   # key projection   (Wc @ x)
            pltpu.VMEM((c_pad, hw), jnp.bfloat16),   # value projection (Wd @ x)
        ],
        compiler_params=pltpu.CompilerParams(
            dimension_semantics=("parallel", "arbitrary"),
            vmem_limit_bytes=vmem_limit),
        cost_estimate=cost,
    )(alpha, wb2, bb2, wc2, bc2, wd2, bd2, x_flat, x_flat)

    if pc:
        out_flat = out_flat[:, :c, :]
    return out_flat.reshape(n, c, h, w)


def pam_reference(x, alpha, wb, bb, wc, bc, wd, bd):
    """Pure-JAX f32 reference mirroring the PyTorch forward."""
    n, c, h, w = x.shape

    def conv1x1(x, W, b):
        return jnp.einsum('oi,nihw->nohw', W.reshape(c, c), x) \
            + b[None, :, None, None]

    B = conv1x1(x, wb, bb).reshape(n, c, h * w).transpose(0, 2, 1)   # (n, hw, c)
    C = conv1x1(x, wc, bc).reshape(n, c, h * w)                      # (n, c, hw)
    D = conv1x1(x, wd, bd).reshape(n, c, h * w).transpose(0, 2, 1)   # (n, hw, c)
    attn = jax.nn.softmax(jnp.einsum('npc,ncq->npq', B, C), axis=-1)
    y = jnp.einsum('npq,nqc->npc', attn, D).transpose(0, 2, 1).reshape(n, c, h, w)
    return alpha[0] * y + x


if __name__ == "__main__":
    key = jax.random.PRNGKey(0)
    n, c, h, w = 2, 4, 16, 16

    k_x, k_wb, k_bb, k_wc, k_bc, k_wd, k_bd = jax.random.split(key, 7)
    x = jax.random.normal(k_x, (n, c, h, w), dtype=jnp.float32)

    # Conv2d(dim, dim, 1): weight (c, c, 1, 1), bias (c,).
    # Note: PyTorch inits alpha to 0; we use 0.5 so the attention path is exercised.
    wb = jax.random.normal(k_wb, (c, c, 1, 1), dtype=jnp.float32) * 0.1
    bb = jax.random.normal(k_bb, (c,), dtype=jnp.float32) * 0.1
    wc = jax.random.normal(k_wc, (c, c, 1, 1), dtype=jnp.float32) * 0.1
    bc = jax.random.normal(k_bc, (c,), dtype=jnp.float32) * 0.1
    wd = jax.random.normal(k_wd, (c, c, 1, 1), dtype=jnp.float32) * 0.1
    bd = jax.random.normal(k_bd, (c,), dtype=jnp.float32) * 0.1
    alpha = jnp.array([0.5], dtype=jnp.float32)

    # tq=128 with hw=256 exercises the multi-tile path (grid = (2, 2)).
    out = pam_forward(x, alpha, wb, bb, wc, bc, wd, bd, tq=128)
    out = jax.block_until_ready(out)

    ref = pam_reference(x, alpha, wb, bb, wc, bc, wd, bd)
    assert out.shape == (n, c, h, w)
    err = jnp.max(jnp.abs(out - ref))
    # bf16 MXU inputs with f32 accumulation -> loosened tolerance vs f32 ref.
    assert jnp.allclose(out, ref, atol=2e-2, rtol=2e-2), f"max abs err {err}"

    print("KERNEL_OK")
</pallas_src>

<mosaic_0001>
module attributes {stable_mosaic.version = 11 : i64} {
  func.func @pam_kernel(%arg0: i32, %arg1: i32, %arg2: memref<1xf32, #tpu.memory_space<smem>>, %arg3: memref<16x16xbf16, #tpu.memory_space<vmem>>, %arg4: memref<16x1xf32, #tpu.memory_space<vmem>>, %arg5: memref<16x16xbf16, #tpu.memory_space<vmem>>, %arg6: memref<16x1xf32, #tpu.memory_space<vmem>>, %arg7: memref<16x16xbf16, #tpu.memory_space<vmem>>, %arg8: memref<16x1xf32, #tpu.memory_space<vmem>>, %arg9: memref<1x16x256xf32, #tpu.memory_space<vmem>>, %arg10: memref<1x16x128xf32, #tpu.memory_space<vmem>>, %arg11: memref<1x16x128xf32, #tpu.memory_space<vmem>>, %arg12: memref<16x256xbf16, #tpu.memory_space<vmem>>, %arg13: memref<16x256xbf16, #tpu.memory_space<vmem>>) attributes {dimension_semantics = [#tpu.dimension_semantics<parallel>, #tpu.dimension_semantics<arbitrary>], iteration_bounds = array<i64: 2, 2>, scalar_prefetch = 0 : i64, scratch_operands = 2 : i64, tpu.core_type = #tpu.core_type<tc>, window_params = [{transform_indices = @transform_0, window_bounds = array<i64: 1>}, {pipeline_mode = #tpu.pipeline_mode<synchronous>, transform_indices = @transform_1, window_bounds = array<i64: 16, 16>}, {pipeline_mode = #tpu.pipeline_mode<synchronous>, transform_indices = @transform_2, window_bounds = array<i64: 16, 1>}, {pipeline_mode = #tpu.pipeline_mode<synchronous>, transform_indices = @transform_3, window_bounds = array<i64: 16, 16>}, {pipeline_mode = #tpu.pipeline_mode<synchronous>, transform_indices = @transform_4, window_bounds = array<i64: 16, 1>}, {pipeline_mode = #tpu.pipeline_mode<synchronous>, transform_indices = @transform_5, window_bounds = array<i64: 16, 16>}, {pipeline_mode = #tpu.pipeline_mode<synchronous>, transform_indices = @transform_6, window_bounds = array<i64: 16, 1>}, {transform_indices = @transform_7, window_bounds = array<i64: 1, 16, 256>}, {transform_indices = @transform_8, window_bounds = array<i64: 1, 16, 128>}, {transform_indices = @transform_9, window_bounds = array<i64: 1, 16, 128>}]} {
    %c0_i32 = arith.constant 0 : i32
    %0 = arith.cmpi eq, %arg1, %c0_i32 : i32
    %1 = arith.extui %0 : i1 to i32
    %c0_i32_0 = arith.constant 0 : i32
    %2 = arith.cmpi ne, %1, %c0_i32_0 : i32
    scf.if %2 {
      %c0_19 = arith.constant 0 : index
      %c0_20 = arith.constant 0 : index
      %c0_21 = arith.constant 0 : index
      %34 = vector.load %arg9[%c0_19, %c0_20, %c0_21] : memref<1x16x256xf32, #tpu.memory_space<vmem>>, vector<1x16x256xf32>
      %35 = vector.shape_cast %34 : vector<1x16x256xf32> to vector<16x256xf32>
      %36 = arith.truncf %35 : vector<16x256xf32> to vector<16x256xbf16>
      %c0_22 = arith.constant 0 : index
      %c0_23 = arith.constant 0 : index
      %37 = vector.load %arg5[%c0_22, %c0_23] : memref<16x16xbf16, #tpu.memory_space<vmem>>, vector<16x16xbf16>
      %cst_24 = arith.constant dense<0.000000e+00> : vector<16x256xf32>
      %38 = tpu.matmul %37, %36, %cst_24 {dimension_numbers = #tpu.dot_dimension_numbers<[1], [0], [0], [1], [0, 0, 1, 1], [], []>} : vector<16x16xbf16>, vector<16x256xbf16>, vector<16x256xf32> -> vector<16x256xf32>
      %c0_25 = arith.constant 0 : index
      %c0_26 = arith.constant 0 : index
      %39 = vector.load %arg6[%c0_25, %c0_26] : memref<16x1xf32, #tpu.memory_space<vmem>>, vector<16x1xf32>
      %40 = vector.broadcast %39 : vector<16x1xf32> to vector<16x256xf32>
      %41 = arith.addf %38, %40 : vector<16x256xf32>
      %42 = arith.truncf %41 : vector<16x256xf32> to vector<16x256xbf16>
      %c0_27 = arith.constant 0 : index
      %c0_28 = arith.constant 0 : index
      %43 = vector.load %arg12[%c0_27, %c0_28] : memref<16x256xbf16, #tpu.memory_space<vmem>>, vector<16x256xbf16>
      tpu.vector_store %arg12[%c0_27, %c0_28], %42 {strides = array<i32>} : memref<16x256xbf16, #tpu.memory_space<vmem>>, vector<16x256xbf16>,
      %c0_29 = arith.constant 0 : index
      %c0_30 = arith.constant 0 : index
      %44 = vector.load %arg7[%c0_29, %c0_30] : memref<16x16xbf16, #tpu.memory_space<vmem>>, vector<16x16xbf16>
      %cst_31 = arith.constant dense<0.000000e+00> : vector<16x256xf32>
      %45 = tpu.matmul %44, %36, %cst_31 {dimension_numbers = #tpu.dot_dimension_numbers<[1], [0], [0], [1], [0, 0, 1, 1], [], []>} : vector<16x16xbf16>, vector<16x256xbf16>, vector<16x256xf32> -> vector<16x256xf32>
      %c0_32 = arith.constant 0 : index
      %c0_33 = arith.constant 0 : index
      %46 = vector.load %arg8[%c0_32, %c0_33] : memref<16x1xf32, #tpu.memory_space<vmem>>, vector<16x1xf32>
      %47 = vector.broadcast %46 : vector<16x1xf32> to vector<16x256xf32>
      %48 = arith.addf %45, %47 : vector<16x256xf32>
      %49 = arith.truncf %48 : vector<16x256xf32> to vector<16x256xbf16>
      %c0_34 = arith.constant 0 : index
      %c0_35 = arith.constant 0 : index
      %50 = vector.load %arg13[%c0_34, %c0_35] : memref<16x256xbf16, #tpu.memory_space<vmem>>, vector<16x256xbf16>
      tpu.vector_store %arg13[%c0_34, %c0_35], %49 {strides = array<i32>} : memref<16x256xbf16, #tpu.memory_space<vmem>>, vector<16x256xbf16>,
    } else {
    }
    %c0 = arith.constant 0 : index
    %c0_1 = arith.constant 0 : index
    %c0_2 = arith.constant 0 : index
    %3 = vector.load %arg10[%c0, %c0_1, %c0_2] : memref<1x16x128xf32, #tpu.memory_space<vmem>>, vector<1x16x128xf32>
    %4 = vector.shape_cast %3 : vector<1x16x128xf32> to vector<16x128xf32>
    %c0_3 = arith.constant 0 : index
    %c0_4 = arith.constant 0 : index
    %5 = vector.load %arg3[%c0_3, %c0_4] : memref<16x16xbf16, #tpu.memory_space<vmem>>, vector<16x16xbf16>
    %6 = arith.truncf %4 : vector<16x128xf32> to vector<16x128xbf16>
    %cst = arith.constant dense<0.000000e+00> : vector<16x128xf32>
    %7 = tpu.matmul %5, %6, %cst {dimension_numbers = #tpu.dot_dimension_numbers<[1], [0], [0], [1], [0, 0, 1, 1], [], []>} : vector<16x16xbf16>, vector<16x128xbf16>, vector<16x128xf32> -> vector<16x128xf32>
    %c0_5 = arith.constant 0 : index
    %c0_6 = arith.constant 0 : index
    %8 = vector.load %arg4[%c0_5, %c0_6] : memref<16x1xf32, #tpu.memory_space<vmem>>, vector<16x1xf32>
    %9 = vector.broadcast %8 : vector<16x1xf32> to vector<16x128xf32>
    %10 = arith.addf %7, %9 : vector<16x128xf32>
    %11 = arith.truncf %10 : vector<16x128xf32> to vector<16x128xbf16>
    %c0_7 = arith.constant 0 : index
    %c0_8 = arith.constant 0 : index
    %12 = vector.load %arg12[%c0_7, %c0_8] : memref<16x256xbf16, #tpu.memory_space<vmem>>, vector<16x256xbf16>
    %cst_9 = arith.constant dense<0.000000e+00> : vector<128x256xf32>
    %13 = tpu.matmul %11, %12, %cst_9 {dimension_numbers = #tpu.dot_dimension_numbers<[0], [0], [1], [1], [0, 1, 1, 1], [], []>} : vector<16x128xbf16>, vector<16x256xbf16>, vector<128x256xf32> -> vector<128x256xf32>
    %cst_10 = arith.constant dense<0xFF800000> : vector<128xf32>
    %14 = vector.multi_reduction <maximumf>, %13, %cst_10 [1] : vector<128x256xf32> to vector<128xf32>
    %15 = vector.shape_cast %14 : vector<128xf32> to vector<128x1xf32>
    %16 = vector.broadcast %15 : vector<128x1xf32> to vector<128x256xf32>
    %17 = arith.subf %13, %16 : vector<128x256xf32>
    %18 = math.exp %17 : vector<128x256xf32>
    %cst_11 = arith.constant dense<0.000000e+00> : vector<128xf32>
    %19 = vector.multi_reduction <add>, %18, %cst_11 [1] : vector<128x256xf32> to vector<128xf32>
    %20 = vector.shape_cast %19 : vector<128xf32> to vector<128x1xf32>
    %21 = tpu.reciprocal %20 {approx = true} : vector<128x1xf32> -> vector<128x1xf32>
    %22 = vector.broadcast %21 : vector<128x1xf32> to vector<128x256xf32>
    %23 = arith.mulf %18, %22 : vector<128x256xf32>
    %c0_12 = arith.constant 0 : index
    %c0_13 = arith.constant 0 : index
    %24 = vector.load %arg13[%c0_12, %c0_13] : memref<16x256xbf16, #tpu.memory_space<vmem>>, vector<16x256xbf16>
    %25 = arith.truncf %23 : vector<128x256xf32> to vector<128x256xbf16>
    %cst_14 = arith.constant dense<0.000000e+00> : vector<16x128xf32>
    %26 = tpu.matmul %24, %25, %cst_14 {dimension_numbers = #tpu.dot_dimension_numbers<[1], [1], [0], [0], [0, 0, 1, 0], [], []>} : vector<16x256xbf16>, vector<128x256xbf16>, vector<16x128xf32> -> vector<16x128xf32>
    %c0_15 = arith.constant 0 : index
    %27 = memref.load %arg2[%c0_15] : memref<1xf32, #tpu.memory_space<smem>>
    %28 = vector.broadcast %27 : f32 to vector<16x128xf32>
    %29 = arith.mulf %28, %26 : vector<16x128xf32>
    %30 = arith.addf %29, %4 : vector<16x128xf32>
    %c0_16 = arith.constant 0 : index
    %c0_17 = arith.constant 0 : index
    %c0_18 = arith.constant 0 : index
    %31 = vector.load %arg11[%c0_16, %c0_17, %c0_18] : memref<1x16x128xf32, #tpu.memory_space<vmem>>, vector<1x16x128xf32>
    %32 = vector.shape_cast %31 : vector<1x16x128xf32> to vector<16x128xf32>
    %33 = vector.shape_cast %30 : vector<16x128xf32> to vector<1x16x128xf32>
    tpu.vector_store %arg11[%c0_16, %c0_17, %c0_18], %33 {strides = array<i32>} : memref<1x16x128xf32, #tpu.memory_space<vmem>>, vector<1x16x128xf32>,
    return
  }
  func.func @transform_0(%arg0: i32, %arg1: i32) -> i32 {
    %c0_i32 = arith.constant 0 : i32
    %c0_i32_0 = arith.constant 0 : i32
    return %c0_i32 : i32
  }
  func.func @transform_1(%arg0: i32, %arg1: i32) -> (i32, i32) {
    %c0_i32 = arith.constant 0 : i32
    %c0_i32_0 = arith.constant 0 : i32
    %c0_i32_1 = arith.constant 0 : i32
    return %c0_i32, %c0_i32_0 : i32, i32
  }
  func.func @transform_2(%arg0: i32, %arg1: i32) -> (i32, i32) {
    %c0_i32 = arith.constant 0 : i32
    %c0_i32_0 = arith.constant 0 : i32
    %c0_i32_1 = arith.constant 0 : i32
    return %c0_i32, %c0_i32_0 : i32, i32
  }
  func.func @transform_3(%arg0: i32, %arg1: i32) -> (i32, i32) {
    %c0_i32 = arith.constant 0 : i32
    %c0_i32_0 = arith.constant 0 : i32
    %c0_i32_1 = arith.constant 0 : i32
    return %c0_i32, %c0_i32_0 : i32, i32
  }
  func.func @transform_4(%arg0: i32, %arg1: i32) -> (i32, i32) {
    %c0_i32 = arith.constant 0 : i32
    %c0_i32_0 = arith.constant 0 : i32
    %c0_i32_1 = arith.constant 0 : i32
    return %c0_i32, %c0_i32_0 : i32, i32
  }
  func.func @transform_5(%arg0: i32, %arg1: i32) -> (i32, i32) {
    %c0_i32 = arith.constant 0 : i32
    %c0_i32_0 = arith.constant 0 : i32
    %c0_i32_1 = arith.constant 0 : i32
    return %c0_i32, %c0_i32_0 : i32, i32
  }
  func.func @transform_6(%arg0: i32, %arg1: i32) -> (i32, i32) {
    %c0_i32 = arith.constant 0 : i32
    %c0_i32_0 = arith.constant 0 : i32
    %c0_i32_1 = arith.constant 0 : i32
    return %c0_i32, %c0_i32_0 : i32, i32
  }
  func.func @transform_7(%arg0: i32, %arg1: i32) -> (i32, i32, i32) {
    %c0_i32 = arith.constant 0 : i32
    %c0_i32_0 = arith.constant 0 : i32
    %c0_i32_1 = arith.constant 0 : i32
    return %arg0, %c0_i32, %c0_i32_0 : i32, i32, i32
  }
  func.func @transform_8(%arg0: i32, %arg1: i32) -> (i32, i32, i32) {
    %c0_i32 = arith.constant 0 : i32
    %c0_i32_0 = arith.constant 0 : i32
    return %arg0, %c0_i32, %arg1 : i32, i32, i32
  }
  func.func @transform_9(%arg0: i32, %arg1: i32) -> (i32, i32, i32) {
    %c0_i32 = arith.constant 0 : i32
    %c0_i32_0 = arith.constant 0 : i32
    return %arg0, %c0_i32, %arg1 : i32, i32, i32
  }
}

</mosaic_0001>

<llo_original>
// kernel: tpu_custom_call.1
$region0: #{tpu_custom_call.1}
  #allocation0 [shape = 'u32[]', space=smem, size = 0x4, offset = 0x4, fixed_abs, tag = 'smem constant byte address 0x4 - core index']
  #allocation1 [shape = 'u32[144,128]{1,0:T(1,128)}', space=vmem, size = 0x12000, scoped, tag = 'internal scratch']
  #allocation2 [shape = 'bf16[16,256]{1,0:T(16,128)(2,1)}', space=vmem, size = 0x2000, scoped, tag = 'scratch operand']
  #allocation3 [shape = 'bf16[16,256]{1,0:T(16,128)(2,1)}', space=vmem, size = 0x2000, scoped, tag = 'scratch operand']
  #allocation4 [shape = 'f32[1]{0:T(128)S(6)}', space=smem, size = 0x200, scoped, tag = 'scoped memory for tpu_custom_call.1']
  %s0 = inlined_call_operand.<no memory space> [shape: f32[1], index: 0, kind: input, shape index: {}]
  %s1 = inlined_call_operand.vmem [shape: bf16[16,16], index: 1, kind: input, shape index: {}]
  %s2 = inlined_call_operand.vmem [shape: f32[16,1], index: 2, kind: input, shape index: {}]
  %s3 = inlined_call_operand.vmem [shape: bf16[16,16], index: 3, kind: input, shape index: {}]
  %s4 = inlined_call_operand.vmem [shape: f32[16,1], index: 4, kind: input, shape index: {}]
  %s5 = inlined_call_operand.vmem [shape: bf16[16,16], index: 5, kind: input, shape index: {}]
  %s6 = inlined_call_operand.vmem [shape: f32[16,1], index: 6, kind: input, shape index: {}]
  %s7 = inlined_call_operand.hbm [shape: f32[2,16,256], index: 7, kind: input, shape index: {}]
  %s8 = inlined_call_operand.hbm [shape: f32[2,16,256], index: 8, kind: input, shape index: {}]
  %s9 = inlined_call_operand.hbm [shape: f32[2,16,256], index: 9, kind: output, shape index: {}]
  %s10 = sld [smem:[#allocation0]]
  $region81: #{tpu_custom_call.1} parent=0
    _
  %s12 = ssub.s32 1, %s10
  %s13 = scalar_select 0, %s12, %s10
  %14 = sst [smem:[#allocation4]] %s0
  $region1: #{tpu_custom_call.1} parent=0
    #allocation5 [shape = 'u8[32768]{0}', space=vmem, size = 0x8000, scoped, tag = 'input window, operand 7']
    #allocation6 [shape = 's32[2]{0}', space=sflag, size = 0x8, scoped, tag = 'scoped memory for tpu_custom_call.1']
    #allocation7 [shape = 's32[2]{0}', space=sflag, size = 0x8, scoped, tag = 'scoped memory for tpu_custom_call.1']
    #allocation8 [shape = 'u8[16384]{0}', space=vmem, size = 0x4000, scoped, tag = 'input window, operand 8']
    #allocation9 [shape = 's32[2]{0}', space=sflag, size = 0x8, scoped, tag = 'scoped memory for tpu_custom_call.1']
    #allocation10 [shape = 'u8[16384]{0}', space=vmem, size = 0x4000, scoped, tag = 'output window, operand 0']
    %15 = vsyncpa [#allocation6], 0
    %s16 = scalar_lea.sflag [#allocation6], 1
    %17 = vsyncpa %s16, 0
    %18 = vsyncpa [#allocation9], 0
    %s19 = scalar_lea.sflag [#allocation9], 1
    %20 = vsyncpa %s19, 0
    %21 = vsyncpa [#allocation7], 0
    %s22 = scalar_lea.sflag [#allocation7], 1
    %23 = vsyncpa %s22, 0
    loop: start=0, step=1, limit=6
    $region2: #{tpu_custom_call.1} parent=1 // loop_pre_header
      _
    $region3: #{tpu_custom_call.1} parent=1 // loop_header
      %s25 = sphi 0, %s29
      %p26 = scmp.ge.s32.totalorder %s25, 6
      %s32 = sphi 0, %s44
      %s33 = sphi 0, %s40
      %s34 = sphi 0, %s32
      %s35 = sphi 0, %s33
      %s36 = sphi 0, %s34
      %s37 = sphi 0, %s35
      %s45 = sphi 0, %s45
      %s47 = sphi 0, %s45
      %s48 = sphi 0, %s47
      %s62 = sphi 0, %s48
      %s66 = sphi 0, %s66
      %s68 = sphi 0, %s66
      %s69 = sphi 0, %s68
      %s83 = sphi 0, %s69
      %s87 = sphi 0, %s87
      %s89 = sphi 0, %s87
      %s90 = sphi 0, %s89
      %s104 = sphi 0, %s90
      %s108 = sphi 0, %s108
      %s110 = sphi 0, %s108
      %s111 = sphi 0, %s110
      %s125 = sphi 0, %s111
      %s129 = sphi 0, %s129
      %s131 = sphi 0, %s129
      %s132 = sphi 0, %s131
      %s146 = sphi 0, %s132
      %s150 = sphi 0, %s150
      %s152 = sphi 0, %s150
      %s153 = sphi 0, %s152
      %s167 = sphi 0, %s153
      %s171 = sphi 0, %s171
      %s173 = sphi 0, %s171
      %s174 = sphi 0, %s173
      %s188 = sphi 0, %s174
      %s194 = sphi 0, %s196
      %s197 = sphi 0, %s194
      %s198 = sphi 0, %s197
      %s214 = sphi 0, %s198
      %s222 = sphi 0, %s224
      %s225 = sphi 0, %s222
      %s226 = sphi 0, %s225
      %s242 = sphi 0, %s226
      %s250 = sphi 0, %s252
      %s253 = sphi 0, %s250
      %s254 = sphi 0, %s253
      %s270 = sphi 0, %s254
    $region4: #{tpu_custom_call.1} parent=1 // loop_header_branch
      %28 = sbr.rel (%p26) target = $region8
    $region5: #{tpu_custom_call.1} parent=1 // loop_body
      %s30 = ssub.s32 %s25, 1
      %s31 = ssub.s32 %s25, 2
      %s38 = sadd.s32 1, %s33
      %p39 = scmp.ge.s32.totalorder %s38, 2
      %s40 = scalar_select %p39, 0, %s38
      %s41 = sadd.s32 1, %s32
      %s42 = scalar_select %p39, %s41, %s32
      %p43 = scmp.ge.s32.totalorder %s42, 2
      %s44 = scalar_select %p43, 0, %s42
      %s46 = sadd.s32 %s45, 1
      %p49 = scmp.eq.s32.totalorder %s25, 3
      %p50 = scmp.ne.s32.totalorder %s45, %s47
      %p51 = scmp.eq.s32.totalorder %s25, 0
      %p52 = por %p50, %p51
      %p53 = scmp.ne.s32.totalorder %s45, %s47
      %p54 = scmp.eq.s32.totalorder %s30, 3
      %p55 = por %p53, %p54
      %p56 = scmp.ne.s32.totalorder %s47, %s48
      %p57 = scmp.eq.s32.totalorder %s30, 0
      %p58 = por %p56, %p57
      %p59 = scmp.ne.s32.totalorder %s47, %s48
      %p60 = scmp.eq.s32.totalorder %s31, 3
      %p61 = por %p59, %p60
      %p63 = scmp.ne.s32.totalorder %s48, %s62
      %p64 = scmp.eq.s32.totalorder %s31, 0
      %p65 = por %p63, %p64
      %s67 = sadd.s32 %s66, 1
      %p70 = scmp.eq.s32.totalorder %s25, 3
      %p71 = scmp.ne.s32.totalorder %s66, %s68
      %p72 = scmp.eq.s32.totalorder %s25, 0
      %p73 = por %p71, %p72
      %p74 = scmp.ne.s32.totalorder %s66, %s68
      %p75 = scmp.eq.s32.totalorder %s30, 3
      %p76 = por %p74, %p75
      %p77 = scmp.ne.s32.totalorder %s68, %s69
      %p78 = scmp.eq.s32.totalorder %s30, 0
      %p79 = por %p77, %p78
      %p80 = scmp.ne.s32.totalorder %s68, %s69
      %p81 = scmp.eq.s32.totalorder %s31, 3
      %p82 = por %p80, %p81
      %p84 = scmp.ne.s32.totalorder %s69, %s83
      %p85 = scmp.eq.s32.totalorder %s31, 0
      %p86 = por %p84, %p85
      %s88 = sadd.s32 %s87, 1
      %p91 = scmp.eq.s32.totalorder %s25, 3
      %p92 = scmp.ne.s32.totalorder %s87, %s89
      %p93 = scmp.eq.s32.totalorder %s25, 0
      %p94 = por %p92, %p93
      %p95 = scmp.ne.s32.totalorder %s87, %s89
      %p96 = scmp.eq.s32.totalorder %s30, 3
      %p97 = por %p95, %p96
      %p98 = scmp.ne.s32.totalorder %s89, %s90
      %p99 = scmp.eq.s32.totalorder %s30, 0
      %p100 = por %p98, %p99
      %p101 = scmp.ne.s32.totalorder %s89, %s90
      %p102 = scmp.eq.s32.totalorder %s31, 3
      %p103 = por %p101, %p102
      %p105 = scmp.ne.s32.totalorder %s90, %s104
      %p106 = scmp.eq.s32.totalorder %s31, 0
      %p107 = por %p105, %p106
      %s109 = sadd.s32 %s108, 1
      %p112 = scmp.eq.s32.totalorder %s25, 3
      %p113 = scmp.ne.s32.totalorder %s108, %s110
      %p114 = scmp.eq.s32.totalorder %s25, 0
      %p115 = por %p113, %p114
      %p116 = scmp.ne.s32.totalorder %s108, %s110
      %p117 = scmp.eq.s32.totalorder %s30, 3
      %p118 = por %p116, %p117
      %p119 = scmp.ne.s32.totalorder %s110, %s111
      %p120 = scmp.eq.s32.totalorder %s30, 0
      %p121 = por %p119, %p120
      %p122 = scmp.ne.s32.totalorder %s110, %s111
      %p123 = scmp.eq.s32.totalorder %s31, 3
      %p124 = por %p122, %p123
      %p126 = scmp.ne.s32.totalorder %s111, %s125
      %p127 = scmp.eq.s32.totalorder %s31, 0
      %p128 = por %p126, %p127
      %s130 = sadd.s32 %s129, 1
      %p133 = scmp.eq.s32.totalorder %s25, 3
      %p134 = scmp.ne.s32.totalorder %s129, %s131
      %p135 = scmp.eq.s32.totalorder %s25, 0
      %p136 = por %p134, %p135
      %p137 = scmp.ne.s32.totalorder %s129, %s131
      %p138 = scmp.eq.s32.totalorder %s30, 3
      %p139 = por %p137, %p138
      %p140 = scmp.ne.s32.totalorder %s131, %s132
      %p141 = scmp.eq.s32.totalorder %s30, 0
      %p142 = por %p140, %p141
      %p143 = scmp.ne.s32.totalorder %s131, %s132
      %p144 = scmp.eq.s32.totalorder %s31, 3
      %p145 = por %p143, %p144
      %p147 = scmp.ne.s32.totalorder %s132, %s146
      %p148 = scmp.eq.s32.totalorder %s31, 0
      %p149 = por %p147, %p148
      %s151 = sadd.s32 %s150, 1
      %p154 = scmp.eq.s32.totalorder %s25, 3
      %p155 = scmp.ne.s32.totalorder %s150, %s152
      %p156 = scmp.eq.s32.totalorder %s25, 0
      %p157 = por %p155, %p156
      %p158 = scmp.ne.s32.totalorder %s150, %s152
      %p159 = scmp.eq.s32.totalorder %s30, 3
      %p160 = por %p158, %p159
      %p161 = scmp.ne.s32.totalorder %s152, %s153
      %p162 = scmp.eq.s32.totalorder %s30, 0
      %p163 = por %p161, %p162
      %p164 = scmp.ne.s32.totalorder %s152, %s153
      %p165 = scmp.eq.s32.totalorder %s31, 3
      %p166 = por %p164, %p165
      %p168 = scmp.ne.s32.totalorder %s153, %s167
      %p169 = scmp.eq.s32.totalorder %s31, 0
      %p170 = por %p168, %p169
      %s172 = sadd.s32 %s171, 1
      %p175 = scmp.eq.s32.totalorder %s25, 3
      %p176 = scmp.ne.s32.totalorder %s171, %s173
      %p177 = scmp.eq.s32.totalorder %s25, 0
      %p178 = por %p176, %p177
      %p179 = scmp.ne.s32.totalorder %s171, %s173
      %p180 = scmp.eq.s32.totalorder %s30, 3
      %p181 = por %p179, %p180
      %p182 = scmp.ne.s32.totalorder %s173, %s174
      %p183 = scmp.eq.s32.totalorder %s30, 0
      %p184 = por %p182, %p183
      %p185 = scmp.ne.s32.totalorder %s173, %s174
      %p186 = scmp.eq.s32.totalorder %s31, 3
      %p187 = por %p185, %p186
      %p189 = scmp.ne.s32.totalorder %s174, %s188
      %p190 = scmp.eq.s32.totalorder %s31, 0
      %p191 = por %p189, %p190
      %s192 = ssub.s32 %s32, %s44
      %p193 = scmp.eq.s32.totalorder %s192, 0
      %s195 = sadd.s32 %s194, 1
      %s196 = scalar_select %p193, %s194, %s195
      %p199 = pneg %p193
      %p200 = scmp.eq.s32.totalorder %s25, 3
      %p201 = por %p199, %p200
      %p202 = scmp.ne.s32.totalorder %s194, %s197
      %p203 = scmp.eq.s32.totalorder %s25, 0
      %p204 = por %p202, %p203
      %p205 = scmp.ne.s32.totalorder %s194, %s197
      %p206 = scmp.eq.s32.totalorder %s30, 3
      %p207 = por %p205, %p206
      %p208 = scmp.ne.s32.totalorder %s197, %s198
      %p209 = scmp.eq.s32.totalorder %s30, 0
      %p210 = por %p208, %p209
      %p211 = scmp.ne.s32.totalorder %s197, %s198
      %p212 = scmp.eq.s32.totalorder %s31, 3
      %p213 = por %p211, %p212
      %p215 = scmp.ne.s32.totalorder %s198, %s214
      %p216 = scmp.eq.s32.totalorder %s31, 0
      %p217 = por %p215, %p216
      %s218 = ssub.s32 %s32, %s44
      %s219 = ssub.s32 %s33, %s40
      %s220 = sor.u32 %s218, %s219
      %p221 = scmp.eq.s32.totalorder %s220, 0
      %s223 = sadd.s32 %s222, 1
      %s224 = scalar_select %p221, %s222, %s223
      %p227 = pneg %p221
      %p228 = scmp.eq.s32.totalorder %s25, 3
      %p229 = por %p227, %p228
      %p230 = scmp.ne.s32.totalorder %s222, %s225
      %p231 = scmp.eq.s32.totalorder %s25, 0
      %p232 = por %p230, %p231
      %p233 = scmp.ne.s32.totalorder %s222, %s225
      %p234 = scmp.eq.s32.totalorder %s30, 3
      %p235 = por %p233, %p234
      %p236 = scmp.ne.s32.totalorder %s225, %s226
      %p237 = scmp.eq.s32.totalorder %s30, 0
      %p238 = por %p236, %p237
      %p239 = scmp.ne.s32.totalorder %s225, %s226
      %p240 = scmp.eq.s32.totalorder %s31, 3
      %p241 = por %p239, %p240
      %p243 = scmp.ne.s32.totalorder %s226, %s242
      %p244 = scmp.eq.s32.totalorder %s31, 0
      %p245 = por %p243, %p244
      %s246 = ssub.s32 %s32, %s44
      %s247 = ssub.s32 %s33, %s40
      %s248 = sor.u32 %s246, %s247
      %p249 = scmp.eq.s32.totalorder %s248, 0
      %s251 = sadd.s32 %s250, 1
      %s252 = scalar_select %p249, %s250, %s251
      %p255 = pneg %p249
      %p256 = scmp.eq.s32.totalorder %s25, 3
      %p257 = por %p255, %p256
      %p258 = scmp.ne.s32.totalorder %s250, %s253
      %p259 = scmp.eq.s32.totalorder %s25, 0
      %p260 = por %p258, %p259
      %p261 = scmp.ne.s32.totalorder %s250, %s253
      %p262 = scmp.eq.s32.totalorder %s30, 3
      %p263 = por %p261, %p262
      %p264 = scmp.ne.s32.totalorder %s253, %s254
      %p265 = scmp.eq.s32.totalorder %s30, 0
      %p266 = por %p264, %p265
      %p267 = scmp.ne.s32.totalorder %s253, %s254
      %p268 = scmp.eq.s32.totalorder %s31, 3
      %p269 = por %p267, %p268
      %p271 = scmp.ne.s32.totalorder %s254, %s270
      %p272 = scmp.eq.s32.totalorder %s31, 0
      %p273 = por %p271, %p272
      %p274 = scmp.le.s32.totalorder 1, %s25
      %p275 = scmp.lt.s32.totalorder %s25, 5
      %p276 = pnand %p274, %p275
      %p277 = pneg %p276
      // Predicated region
      $region9: #{tpu_custom_call.1} parent=5 // pred_check
        _
      $region10: #{tpu_custom_call.1} parent=5 // pred_check_branch
        %279 = sbr.rel (%p276) target = $region12
      $region11: #{tpu_custom_call.1} parent=5 // pred_region
        %s280 = ssub.s32 %s25, 1
        // Predicated region
        $region13: #{tpu_custom_call.1} parent=11 // pred_check
          %p281 = pneg %p58
        $region14: #{tpu_custom_call.1} parent=11 // pred_check_branch
          %283 = sbr.rel (%p281) target = $region16
        $region15: #{tpu_custom_call.1} parent=11 // pred_region
          _
        $region16: #{tpu_custom_call.1} parent=11 // pred_fallthru
          _
        // Predicated region
        $region17: #{tpu_custom_call.1} parent=11 // pred_check
          %p284 = pneg %p79
        $region18: #{tpu_custom_call.1} parent=11 // pred_check_branch
          %286 = sbr.rel (%p284) target = $region20
        $region19: #{tpu_custom_call.1} parent=11 // pred_region
          _
        $region20: #{tpu_custom_call.1} parent=11 // pred_fallthru
          _
        // Predicated region
        $region21: #{tpu_custom_call.1} parent=11 // pred_check
          %p287 = pneg %p100
        $region22: #{tpu_custom_call.1} parent=11 // pred_check_branch
          %289 = sbr.rel (%p287) target = $region24
        $region23: #{tpu_custom_call.1} parent=11 // pred_region
          _
        $region24: #{tpu_custom_call.1} parent=11 // pred_fallthru
          _
        // Predicated region
        $region25: #{tpu_custom_call.1} parent=11 // pred_check
          %p290 = pneg %p121
        $region26: #{tpu_custom_call.1} parent=11 // pred_check_branch
          %292 = sbr.rel (%p290) target = $region28
        $region27: #{tpu_custom_call.1} parent=11 // pred_region
          _
        $region28: #{tpu_custom_call.1} parent=11 // pred_fallthru
          _
        // Predicated region
        $region29: #{tpu_custom_call.1} parent=11 // pred_check
          %p293 = pneg %p142
        $region30: #{tpu_custom_call.1} parent=11 // pred_check_branch
          %295 = sbr.rel (%p293) target = $region32
        $region31: #{tpu_custom_call.1} parent=11 // pred_region
          _
        $region32: #{tpu_custom_call.1} parent=11 // pred_fallthru
          _
        // Predicated region
        $region33: #{tpu_custom_call.1} parent=11 // pred_check
          %p296 = pneg %p163
        $region34: #{tpu_custom_call.1} parent=11 // pred_check_branch
          %298 = sbr.rel (%p296) target = $region36
        $region35: #{tpu_custom_call.1} parent=11 // pred_region
          _
        $region36: #{tpu_custom_call.1} parent=11 // pred_fallthru
          _
        // Predicated region
        $region37: #{tpu_custom_call.1} parent=11 // pred_check
          %p299 = pneg %p184
        $region38: #{tpu_custom_call.1} parent=11 // pred_check_branch
          %301 = sbr.rel (%p299) target = $region40
        $region39: #{tpu_custom_call.1} parent=11 // pred_region
          _
        $region40: #{tpu_custom_call.1} parent=11 // pred_fallthru
          _
      $region12: #{tpu_custom_call.1} parent=5 // pred_fallthru
        _
      %p302 = scmp.lt.s32.totalorder %s25, 4
      // Predicated region
      $region41: #{tpu_custom_call.1} parent=5 // pred_check
        %p303 = pneg %p302
      $region42: #{tpu_custom_call.1} parent=5 // pred_check_branch
        %305 = sbr.rel (%p303) target = $region44
      $region43: #{tpu_custom_call.1} parent=5 // pred_region
        // Predicated region
        $region45: #{tpu_custom_call.1} parent=43 // pred_check
          %p306 = pneg %p204
        $region46: #{tpu_custom_call.1} parent=43 // pred_check_branch
          %308 = sbr.rel (%p306) target = $region48
        $region47: #{tpu_custom_call.1} parent=43 // pred_region
          %s309 = sand.u32 %s194, 1
          %s310 = scalar_lea.sflag [#allocation6], %s309
          %s311 = sand.u32 %s194, 1
          %s312 = smul.addr %s311, 32
          %s313 = scalar_lea.vmem [#allocation5], %s312
          %s315 = ssub.s32 512, 512
          %316 = vsyncadd %s310, %s315
          %s317 = smul.addr %s32, 4
          %s318 = smul.addr %s317, 128
          %s319 = scalar_lea.hbm %s7, %s318
          %s320 = sshll.u32 %s313, 4
          %s321 = int_to_ptr.vmem [resolvable:$true] %s320
          %326 = dma.hbm_to_vmem [thread:$0]  %s319, 512, %s321, %s310, 256, 256, 16
        $region48: #{tpu_custom_call.1} parent=43 // pred_fallthru
          _
        // Predicated region
        $region49: #{tpu_custom_call.1} parent=43 // pred_check
          %p327 = pneg %p232
        $region50: #{tpu_custom_call.1} parent=43 // pred_check_branch
          %329 = sbr.rel (%p327) target = $region52
        $region51: #{tpu_custom_call.1} parent=43 // pred_region
          %s330 = sand.u32 %s222, 1
          %s331 = scalar_lea.sflag [#allocation9], %s330
          %s332 = sand.u32 %s222, 1
          %s333 = smul.addr %s332, 16
          %s334 = scalar_lea.vmem [#allocation8], %s333
          %s336 = ssub.s32 256, 256
          %337 = vsyncadd %s331, %s336
          %s338 = smul.addr %s32, 4
          %s339 = sadd.s32 %s33, %s338
          %s340 = smul.addr %s339, 128
          %s341 = scalar_lea.hbm %s8, %s340
          %s342 = sshll.u32 %s334, 4
          %s343 = int_to_ptr.vmem [resolvable:$true] %s342
          %348 = dma.hbm_to_vmem [thread:$0]  %s341, 256, %s343, %s331, 256, 128, 8
        $region52: #{tpu_custom_call.1} parent=43 // pred_fallthru
          _
      $region44: #{tpu_custom_call.1} parent=5 // pred_fallthru
        _
      %p349 = scmp.le.s32.totalorder 1, %s25
      %p350 = scmp.lt.s32.totalorder %s25, 5
      %p351 = pnand %p349, %p350
      %p352 = pneg %p351
      // Predicated region
      $region53: #{tpu_custom_call.1} parent=5 // pred_check
        _
      $region54: #{tpu_custom_call.1} parent=5 // pred_check_branch
        %354 = sbr.rel (%p351) target = $region56
      $region55: #{tpu_custom_call.1} parent=5 // pred_region
        %s355 = ssub.s32 %s25, 1
        %s356 = sand.u32 %s197, 1
        %s357 = scalar_lea.sflag [#allocation6], %s356
        %s358 = sand.u32 %s197, 1
        %s359 = smul.addr %s358, 32
        %s360 = scalar_lea.vmem [#allocation5], %s359
        // Predicated region
        $region57: #{tpu_custom_call.1} parent=55 // pred_check
          %p361 = pneg %p210
        $region58: #{tpu_custom_call.1} parent=55 // pred_check_branch
          %363 = sbr.rel (%p361) target = $region60
        $region59: #{tpu_custom_call.1} parent=55 // pred_region
          %364 = dma.done %s357, 512
        $region60: #{tpu_custom_call.1} parent=55 // pred_fallthru
          _
        %s365 = sand.u32 %s225, 1
        %s366 = scalar_lea.sflag [#allocation9], %s365
        %s367 = sand.u32 %s225, 1
        %s368 = smul.addr %s367, 16
        %s369 = scalar_lea.vmem [#allocation8], %s368
        // Predicated region
        $region61: #{tpu_custom_call.1} parent=55 // pred_check
          %p370 = pneg %p238
        $region62: #{tpu_custom_call.1} parent=55 // pred_check_branch
          %372 = sbr.rel (%p370) target = $region64
        $region63: #{tpu_custom_call.1} parent=55 // pred_region
          %373 = dma.done %s366, 256
        $region64: #{tpu_custom_call.1} parent=55 // pred_fallthru
          _
        %p374 = pneg %p58
        %p375 = pneg %p55
        %p376 = pneg %p79
        %p377 = pneg %p76
        %p378 = pneg %p100
        %p379 = pneg %p97
        %p380 = pneg %p121
        %p381 = pneg %p118
        %p382 = pneg %p142
        %p383 = pneg %p139
        %p384 = pneg %p163
        %p385 = pneg %p160
        %p386 = pneg %p184
        %p387 = pneg %p181
        %s388 = sand.u32 %s197, 1
        %s389 = scalar_lea.sflag [#allocation6], %s388
        %s390 = sand.u32 %s197, 1
        %s391 = smul.addr %s390, 32
        %s392 = scalar_lea.vmem [#allocation5], %s391
        %p393 = pneg %p210
        %p394 = pneg %p207
        %s395 = sand.u32 %s225, 1
        %s396 = scalar_lea.sflag [#allocation9], %s395
        %s397 = sand.u32 %s225, 1
        %s398 = smul.addr %s397, 16
        %s399 = scalar_lea.vmem [#allocation8], %s398
        %p400 = pneg %p238
        %p401 = pneg %p235
        %p402 = pneg %p266
        %p403 = pneg %p263
        %s404 = sand.u32 %s253, 1
        %s405 = scalar_lea.sflag [#allocation7], %s404
        %s406 = sand.u32 %s253, 1
        %s407 = smul.addr %s406, 16
        %s408 = scalar_lea.vmem [#allocation10], %s407
        %p410 = scmp.eq.s32.totalorder %s35, 0
        // Predicated region
        $region65: #{tpu_custom_call.1} parent=55 // pred_check
          %p411 = pneg %p410
        $region66: #{tpu_custom_call.1} parent=55 // pred_check_branch
          %413 = sbr.rel (%p411) target = $region68
        $region67: #{tpu_custom_call.1} parent=55 // pred_region
          %v414 = vld [vmem:[%s360] sm:$0xff]
          %v415 = vld [vmem:[%s360 + $0x8] sm:$0xff]
          %v416 = vld [vmem:[%s360 + $0x10] sm:$0xff]
          %v417 = vld [vmem:[%s360 + $0x18] sm:$0xff]
          %v418 = vpack.c.bf16 %v416, %v414
          %v419 = vpack.c.bf16 %v417, %v415
          %v420 = vld [vmem:[%s3] sm:$0xf]
          %v421 = vld [vmem:[%s3 + $0x4] sm:$0xf]
          %v422 = vld [vmem:[%s4] sm:$0xff]
          %v423 = vld [vmem:[%s4 + $0x8] sm:$0xff]
          %425 = vset.pattern.permute.xlu0 0
          %426 = vperm.xlu0 %425, %v422
          %v427 = vpop.permute.xlu0 %426
          %430 = vset.pattern.permute.xlu0 0
          %431 = vperm.xlu0 %430, %v423
          %v432 = vpop.permute.xlu0 %431
          %v436 = vunpack.c.l.b16 %v420
          %v437 = vunpack.c.l.b16 %v421
          %v438 = vpack.c.b16 %v437, %v436
          %vm439 = vcmask 130048
          %v441 = vsel %vm439, %v438, 0
          %443 = vmatprep.subr.bf16.mxu0 %v419
          %444 = vmatpush1.bf16.msra.mxu0 %v418
          %445 = vmatprep.subr.bf16.mxu0 0
          %446 = vmatpush1.bf16.msra.mxu0 0
          %447 = vmatprep.subr.bf16.mxu0 0
          %448 = vmatpush1.bf16.msra.mxu0 0
          %449 = vmatprep.subr.bf16.mxu0 0
          %450 = vmatpush1.bf16.msra.mxu0 0
          %451 = vmatprep.subr.bf16.mxu0 0
          %452 = vmatpush1.bf16.msra.mxu0 0
          %453 = vmatprep.subr.bf16.mxu0 0
          %454 = vmatpush1.bf16.msra.mxu0 0
          %455 = vmatprep.subr.bf16.mxu0 0
          %456 = vmatpush1.bf16.msra.mxu0 0
          %457 = vmatprep.subr.bf16.mxu0 0
          %458 = vmatpush1.bf16.msra.mxu0 0
          %459 = vmatprep.subr.bf16.mxu0 0
          %460 = vmatpush1.bf16.msra.mxu0 0
          %461 = vmatprep.subr.bf16.mxu0 0
          %462 = vmatpush1.bf16.msra.mxu0 0
          %463 = vmatprep.subr.bf16.mxu0 0
          %464 = vmatpush1.bf16.msra.mxu0 0
          %465 = vmatprep.subr.bf16.mxu0 0
          %466 = vmatpush1.bf16.msra.mxu0 0
          %467 = vmatprep.subr.bf16.mxu0 0
          %468 = vmatpush1.bf16.msra.mxu0 0
          %469 = vmatprep.subr.bf16.mxu0 0
          %470 = vmatpush1.bf16.msra.mxu0 0
          %471 = vmatprep.subr.bf16.mxu0 0
          %472 = vmatpush1.bf16.msra.mxu0 0
          %473 = vmatprep.subr.bf16.mxu0 0
          %474 = vmatpush1.bf16.msra.mxu0 0
          %475 = vmatprep.mubr.bf16.mxu0 0
          %476 = vmatmul.mubr.bf16.gmra.mrb[0].mxu0 %v441
          %v477 = vpop.f32.mrb[0].mxu0
          %v478 = vadd.f32 %v427, %v477
          %v479 = vpop.f32.mrb[0].mxu0
          %v480 = vadd.f32 %v427, %v479
          %v481 = vpop.f32.mrb[0].mxu0
          %v482 = vadd.f32 %v432, %v481
          %v483 = vpop.f32.mrb[0].mxu0
          %v484 = vadd.f32 %v432, %v483
          %485 = vdwg.mxu0
          %v486 = vpack.c.bf16 %v482, %v478
          %v487 = vpack.c.bf16 %v484, %v480
          %488 = vst [vmem:[#allocation2] sm:$0xff] %v486
          %489 = vst [vmem:[#allocation2 + $0x8] sm:$0xff] %v487
          %v490 = vld [vmem:[%s5] sm:$0xf]
          %v491 = vld [vmem:[%s5 + $0x4] sm:$0xf]
          %v492 = vld [vmem:[%s6] sm:$0xff]
          %v493 = vld [vmem:[%s6 + $0x8] sm:$0xff]
          %495 = vset.pattern.permute.xlu0 0
          %496 = vperm.xlu0 %495, %v492
          %v497 = vpop.permute.xlu0 %496
          %500 = vset.pattern.permute.xlu0 0
          %501 = vperm.xlu0 %500, %v493
          %v502 = vpop.permute.xlu0 %501
          %v506 = vunpack.c.l.b16 %v490
          %v507 = vunpack.c.l.b16 %v491
          %v508 = vpack.c.b16 %v507, %v506
          %v510 = vsel %vm439, %v508, 0
          %512 = vmatprep.subr.bf16.mxu0 %v419
          %513 = vmatpush1.bf16.msra.mxu0 %v418
          %514 = vmatprep.subr.bf16.mxu0 0
          %515 = vmatpush1.bf16.msra.mxu0 0
          %516 = vmatprep.subr.bf16.mxu0 0
          %517 = vmatpush1.bf16.msra.mxu0 0
          %518 = vmatprep.subr.bf16.mxu0 0
          %519 = vmatpush1.bf16.msra.mxu0 0
          %520 = vmatprep.subr.bf16.mxu0 0
          %521 = vmatpush1.bf16.msra.mxu0 0
          %522 = vmatprep.subr.bf16.mxu0 0
          %523 = vmatpush1.bf16.msra.mxu0 0
          %524 = vmatprep.subr.bf16.mxu0 0
          %525 = vmatpush1.bf16.msra.mxu0 0
          %526 = vmatprep.subr.bf16.mxu0 0
          %527 = vmatpush1.bf16.msra.mxu0 0
          %528 = vmatprep.subr.bf16.mxu0 0
          %529 = vmatpush1.bf16.msra.mxu0 0
          %530 = vmatprep.subr.bf16.mxu0 0
          %531 = vmatpush1.bf16.msra.mxu0 0
          %532 = vmatprep.subr.bf16.mxu0 0
          %533 = vmatpush1.bf16.msra.mxu0 0
          %534 = vmatprep.subr.bf16.mxu0 0
          %535 = vmatpush1.bf16.msra.mxu0 0
          %536 = vmatprep.subr.bf16.mxu0 0
          %537 = vmatpush1.bf16.msra.mxu0 0
          %538 = vmatprep.subr.bf16.mxu0 0
          %539 = vmatpush1.bf16.msra.mxu0 0
          %540 = vmatprep.subr.bf16.mxu0 0
          %541 = vmatpush1.bf16.msra.mxu0 0
          %542 = vmatprep.subr.bf16.mxu0 0
          %543 = vmatpush1.bf16.msra.mxu0 0
          %544 = vmatprep.mubr.bf16.mxu0 0
          %545 = vmatmul.mubr.bf16.gmra.mrb[0].mxu0 %v510
          %v546 = vpop.f32.mrb[0].mxu0
          %v547 = vadd.f32 %v497, %v546
          %v548 = vpop.f32.mrb[0].mxu0
          %v549 = vadd.f32 %v497, %v548
          %v550 = vpop.f32.mrb[0].mxu0
          %v551 = vadd.f32 %v502, %v550
          %v552 = vpop.f32.mrb[0].mxu0
          %v553 = vadd.f32 %v502, %v552
          %554 = vdwg.mxu0
          %v555 = vpack.c.bf16 %v551, %v547
          %v556 = vpack.c.bf16 %v553, %v549
          %557 = vst [vmem:[#allocation3] sm:$0xff] %v555
          %558 = vst [vmem:[#allocation3 + $0x8] sm:$0xff] %v556
        $region68: #{tpu_custom_call.1} parent=55 // pred_fallthru
          _
        %v559 = vld [vmem:[%s369] sm:$0xff]
        %v560 = vld [vmem:[%s369 + $0x8] sm:$0xff]
        %v561 = vld [vmem:[%s1] sm:$0xf]
        %v562 = vld [vmem:[%s1 + $0x4] sm:$0xf]
        %v563 = vpack.c.bf16 %v560, %v559
        %v564 = vld [vmem:[%s2] sm:$0xff]
        %v565 = vld [vmem:[%s2 + $0x8] sm:$0xff]
        %567 = vset.pattern.permute.xlu0 0
        %568 = vperm.xlu0 %567, %v564
        %v569 = vpop.permute.xlu0 %568
        %572 = vset.pattern.permute.xlu0 0
        %573 = vperm.xlu0 %572, %v565
        %v574 = vpop.permute.xlu0 %573
        %v578 = vunpack.c.l.b16 %v561
        %v579 = vunpack.c.l.b16 %v562
        %v580 = vpack.c.b16 %v579, %v578
        %vm581 = vcmask 130048
        %v583 = vsel %vm581, %v580, 0
        %585 = vmatprep.subr.bf16.mxu0 0
        %586 = vmatpush1.bf16.msra.mxu0 %v563
        %587 = vmatprep.subr.bf16.mxu0 0
        %588 = vmatpush1.bf16.msra.mxu0 0
        %589 = vmatprep.subr.bf16.mxu0 0
        %590 = vmatpush1.bf16.msra.mxu0 0
        %591 = vmatprep.subr.bf16.mxu0 0
        %592 = vmatpush1.bf16.msra.mxu0 0
        %593 = vmatprep.subr.bf16.mxu0 0
        %594 = vmatpush1.bf16.msra.mxu0 0
        %595 = vmatprep.subr.bf16.mxu0 0
        %596 = vmatpush1.bf16.msra.mxu0 0
        %597 = vmatprep.subr.bf16.mxu0 0
        %598 = vmatpush1.bf16.msra.mxu0 0
        %599 = vmatprep.subr.bf16.mxu0 0
        %600 = vmatpush1.bf16.msra.mxu0 0
        %601 = vmatprep.subr.bf16.mxu0 0
        %602 = vmatpush1.bf16.msra.mxu0 0
        %603 = vmatprep.subr.bf16.mxu0 0
        %604 = vmatpush1.bf16.msra.mxu0 0
        %605 = vmatprep.subr.bf16.mxu0 0
        %606 = vmatpush1.bf16.msra.mxu0 0
        %607 = vmatprep.subr.bf16.mxu0 0
        %608 = vmatpush1.bf16.msra.mxu0 0
        %609 = vmatprep.subr.bf16.mxu0 0
        %610 = vmatpush1.bf16.msra.mxu0 0
        %611 = vmatprep.subr.bf16.mxu0 0
        %612 = vmatpush1.bf16.msra.mxu0 0
        %613 = vmatprep.subr.bf16.mxu0 0
        %614 = vmatpush1.bf16.msra.mxu0 0
        %615 = vmatprep.subr.bf16.mxu0 0
        %616 = vmatpush1.bf16.msra.mxu0 0
        %617 = vmatprep.mubr.bf16.mxu0 0
        %618 = vmatmul.mubr.bf16.gmra.mrb[0].mxu0 %v583
        %v619 = vpop.f32.mrb[0].mxu0
        %v620 = vadd.f32 %v569, %v619
        %v621 = vpop.f32.mrb[0].mxu0
        %v622 = vpop.f32.mrb[0].mxu0
        %v623 = vadd.f32 %v574, %v622
        %v624 = vpop.f32.mrb[0].mxu0
        %625 = vdwg.mxu0
        %v626 = vpack.c.bf16 %v623, %v620
        %v627 = vld [vmem:[#allocation2] sm:$0xff]
        %v628 = vld [vmem:[#allocation2 + $0x8] sm:$0xff]
        %629 = vxpose.xlu0.c.b16.start [1/8] %v626, 128
        %630 = vxpose.xlu0.c.b16.cont [2/8] 0, 128
        %631 = vxpose.xlu0.c.b16.cont [3/8] 0, 128
        %632 = vxpose.xlu0.c.b16.cont [4/8] 0, 128
        %633 = vxpose.xlu0.c.b16.cont [5/8] 0, 128
        %634 = vxpose.xlu0.c.b16.cont [6/8] 0, 128
        %635 = vxpose.xlu0.c.b16.cont [7/8] 0, 128
        %636 = vxpose.xlu0.c.b16.end [8/8] 0, 128
        %v637 = vpop.trf.xlu0
        %v638 = vpop.trf.xlu0
        %v639 = vpop.trf.xlu0
        %v640 = vpop.trf.xlu0
        %v641 = vpop.trf.xlu0
        %v642 = vpop.trf.xlu0
        %v643 = vpop.trf.xlu0
        %v644 = vpop.trf.xlu0
        %v646 = vsel %vm581, %v637, 0
        %v649 = vsel %vm581, %v638, 0
        %v652 = vsel %vm581, %v639, 0
        %v655 = vsel %vm581, %v640, 0
        %v658 = vsel %vm581, %v641, 0
        %v661 = vsel %vm581, %v642, 0
        %v664 = vsel %vm581, %v643, 0
        %v667 = vsel %vm581, %v644, 0
        %669 = vmatprep.subr.bf16.mxu0 %v628
        %670 = vmatpush1.bf16.msra.mxu0 %v627
        %671 = vmatprep.subr.bf16.mxu0 0
        %672 = vmatpush1.bf16.msra.mxu0 0
        %673 = vmatprep.subr.bf16.mxu0 0
        %674 = vmatpush1.bf16.msra.mxu0 0
        %675 = vmatprep.subr.bf16.mxu0 0
        %676 = vmatpush1.bf16.msra.mxu0 0
        %677 = vmatprep.subr.bf16.mxu0 0
        %678 = vmatpush1.bf16.msra.mxu0 0
        %679 = vmatprep.subr.bf16.mxu0 0
        %680 = vmatpush1.bf16.msra.mxu0 0
        %681 = vmatprep.subr.bf16.mxu0 0
        %682 = vmatpush1.bf16.msra.mxu0 0
        %683 = vmatprep.subr.bf16.mxu0 0
        %684 = vmatpush1.bf16.msra.mxu0 0
        %685 = vmatprep.subr.bf16.mxu0 0
        %686 = vmatpush1.bf16.msra.mxu0 0
        %687 = vmatprep.subr.bf16.mxu0 0
        %688 = vmatpush1.bf16.msra.mxu0 0
        %689 = vmatprep.subr.bf16.mxu0 0
        %690 = vmatpush1.bf16.msra.mxu0 0
        %691 = vmatprep.subr.bf16.mxu0 0
        %692 = vmatpush1.bf16.msra.mxu0 0
        %693 = vmatprep.subr.bf16.mxu0 0
        %694 = vmatpush1.bf16.msra.mxu0 0
        %695 = vmatprep.subr.bf16.mxu0 0
        %696 = vmatpush1.bf16.msra.mxu0 0
        %697 = vmatprep.subr.bf16.mxu0 0
        %698 = vmatpush1.bf16.msra.mxu0 0
        %699 = vmatprep.subr.bf16.mxu0 0
        %700 = vmatpush1.bf16.msra.mxu0 0
        %701 = vmatprep.mubr.bf16.mxu0 0
        %702 = vmatmul.mubr.bf16.gmra.mrb[0].mxu0 %v646
        %v703 = vpop.f32.mrb[0].mxu0
        %v704 = vadd.f32 0.0, %v703
        %v705 = vpop.f32.mrb[0].mxu0
        %v706 = vadd.f32 0.0, %v705
        %v707 = vpop.f32.mrb[0].mxu0
        %v708 = vadd.f32 0.0, %v707
        %v709 = vpop.f32.mrb[0].mxu0
        %v710 = vadd.f32 0.0, %v709
        %711 = vmatprep.mubr.bf16.mxu0 0
        %712 = vmatmul.mubr.bf16.gmra.mrb[0].mxu0 %v649
        %v713 = vpop.f32.mrb[0].mxu0
        %v714 = vadd.f32 0.0, %v713
        %v715 = vpop.f32.mrb[0].mxu0
        %v716 = vadd.f32 0.0, %v715
        %v717 = vpop.f32.mrb[0].mxu0
        %v718 = vadd.f32 0.0, %v717
        %v719 = vpop.f32.mrb[0].mxu0
        %v720 = vadd.f32 0.0, %v719
        %721 = vmatprep.mubr.bf16.mxu0 0
        %722 = vmatmul.mubr.bf16.gmra.mrb[0].mxu0 %v652
        %v723 = vpop.f32.mrb[0].mxu0
        %v724 = vadd.f32 0.0, %v723
        %v725 = vpop.f32.mrb[0].mxu0
        %v726 = vadd.f32 0.0, %v725
        %v727 = vpop.f32.mrb[0].mxu0
        %v728 = vadd.f32 0.0, %v727
        %v729 = vpop.f32.mrb[0].mxu0
        %v730 = vadd.f32 0.0, %v729
        %731 = vmatprep.mubr.bf16.mxu0 0
        %732 = vmatmul.mubr.bf16.gmra.mrb[0].mxu0 %v655
        %v733 = vpop.f32.mrb[0].mxu0
        %v734 = vadd.f32 0.0, %v733
        %v735 = vpop.f32.mrb[0].mxu0
        %v736 = vadd.f32 0.0, %v735
        %v737 = vpop.f32.mrb[0].mxu0
        %v738 = vadd.f32 0.0, %v737
        %v739 = vpop.f32.mrb[0].mxu0
        %v740 = vadd.f32 0.0, %v739
        %741 = vmatprep.mubr.bf16.mxu0 0
        %742 = vmatmul.mubr.bf16.gmra.mrb[0].mxu0 %v658
        %v743 = vpop.f32.mrb[0].mxu0
        %v744 = vadd.f32 0.0, %v743
        %v745 = vpop.f32.mrb[0].mxu0
        %v746 = vadd.f32 0.0, %v745
        %v747 = vpop.f32.mrb[0].mxu0
        %v748 = vadd.f32 0.0, %v747
        %v749 = vpop.f32.mrb[0].mxu0
        %v750 = vadd.f32 0.0, %v749
        %751 = vmatprep.mubr.bf16.mxu0 0
        %752 = vmatmul.mubr.bf16.gmra.mrb[0].mxu0 %v661
        %v753 = vpop.f32.mrb[0].mxu0
        %v754 = vadd.f32 0.0, %v753
        %v755 = vpop.f32.mrb[0].mxu0
        %v756 = vadd.f32 0.0, %v755
        %v757 = vpop.f32.mrb[0].mxu0
        %v758 = vadd.f32 0.0, %v757
        %v759 = vpop.f32.mrb[0].mxu0
        %v760 = vadd.f32 0.0, %v759
        %761 = vmatprep.mubr.bf16.mxu0 0
        %762 = vmatmul.mubr.bf16.gmra.mrb[0].mxu0 %v664
        %v763 = vpop.f32.mrb[0].mxu0
        %v764 = vadd.f32 0.0, %v763
        %v765 = vpop.f32.mrb[0].mxu0
        %v766 = vadd.f32 0.0, %v765
        %v767 = vpop.f32.mrb[0].mxu0
        %v768 = vadd.f32 0.0, %v767
        %v769 = vpop.f32.mrb[0].mxu0
        %v770 = vadd.f32 0.0, %v769
        %771 = vmatprep.mubr.bf16.mxu0 0
        %772 = vmatmul.mubr.bf16.gmra.mrb[0].mxu0 %v667
        %v773 = vpop.f32.mrb[0].mxu0
        %v774 = vadd.f32 0.0, %v773
        %v775 = vpop.f32.mrb[0].mxu0
        %v776 = vadd.f32 0.0, %v775
        %v777 = vpop.f32.mrb[0].mxu0
        %v778 = vadd.f32 0.0, %v777
        %v779 = vpop.f32.mrb[0].mxu0
        %v780 = vadd.f32 0.0, %v779
        %781 = vdwg.mxu0
        %v782 = vmax.f32 %v704, %v706
        %783 = vmax.xlane.f32.xlu0 %v782
        %v784 = vpop.xlane.xlu0 %783
        %v785 = vmax.f32 %v708, %v710
        %786 = vmax.xlane.f32.xlu0 %v785
        %v787 = vpop.xlane.xlu0 %786
        %v788 = vmax.f32 %v714, %v716
        %789 = vmax.xlane.f32.xlu0 %v788
        %v790 = vpop.xlane.xlu0 %789
        %v791 = vmax.f32 %v718, %v720
        %792 = vmax.xlane.f32.xlu0 %v791
        %v793 = vpop.xlane.xlu0 %792
        %v794 = vmax.f32 %v724, %v726
        %795 = vmax.xlane.f32.xlu0 %v794
        %v796 = vpop.xlane.xlu0 %795
        %v797 = vmax.f32 %v728, %v730
        %798 = vmax.xlane.f32.xlu0 %v797
        %v799 = vpop.xlane.xlu0 %798
        %v800 = vmax.f32 %v734, %v736
        %801 = vmax.xlane.f32.xlu0 %v800
        %v802 = vpop.xlane.xlu0 %801
        %v803 = vmax.f32 %v738, %v740
        %804 = vmax.xlane.f32.xlu0 %v803
        %v805 = vpop.xlane.xlu0 %804
        %v806 = vmax.f32 %v744, %v746
        %807 = vmax.xlane.f32.xlu0 %v806
        %v808 = vpop.xlane.xlu0 %807
        %v809 = vmax.f32 %v748, %v750
        %810 = vmax.xlane.f32.xlu0 %v809
        %v811 = vpop.xlane.xlu0 %810
        %v812 = vmax.f32 %v754, %v756
        %813 = vmax.xlane.f32.xlu0 %v812
        %v814 = vpop.xlane.xlu0 %813
        %v815 = vmax.f32 %v758, %v760
        %816 = vmax.xlane.f32.xlu0 %v815
        %v817 = vpop.xlane.xlu0 %816
        %v818 = vmax.f32 %v764, %v766
        %819 = vmax.xlane.f32.xlu0 %v818
        %v820 = vpop.xlane.xlu0 %819
        %v821 = vmax.f32 %v768, %v770
        %822 = vmax.xlane.f32.xlu0 %v821
        %v823 = vpop.xlane.xlu0 %822
        %v824 = vmax.f32 %v774, %v776
        %825 = vmax.xlane.f32.xlu0 %v824
        %v826 = vpop.xlane.xlu0 %825
        %v827 = vmax.f32 %v778, %v780
        %828 = vmax.xlane.f32.xlu0 %v827
        %v829 = vpop.xlane.xlu0 %828
        %v830 = vsub.f32 %v704, %v784
        %v831 = vsub.f32 %v706, %v784
        %v832 = vsub.f32 %v708, %v787
        %v833 = vsub.f32 %v710, %v787
        %v834 = vsub.f32 %v714, %v790
        %v835 = vsub.f32 %v716, %v790
        %v836 = vsub.f32 %v718, %v793
        %v837 = vsub.f32 %v720, %v793
        %v838 = vsub.f32 %v724, %v796
        %v839 = vsub.f32 %v726, %v796
        %v840 = vsub.f32 %v728, %v799
        %v841 = vsub.f32 %v730, %v799
        %v842 = vsub.f32 %v734, %v802
        %v843 = vsub.f32 %v736, %v802
        %v844 = vsub.f32 %v738, %v805
        %v845 = vsub.f32 %v740, %v805
        %v846 = vsub.f32 %v744, %v808
        %v847 = vsub.f32 %v746, %v808
        %v848 = vsub.f32 %v748, %v811
        %v849 = vsub.f32 %v750, %v811
        %v850 = vsub.f32 %v754, %v814
        %v851 = vsub.f32 %v756, %v814
        %v852 = vsub.f32 %v758, %v817
        %v853 = vsub.f32 %v760, %v817
        %v854 = vsub.f32 %v764, %v820
        %v855 = vsub.f32 %v766, %v820
        %v856 = vsub.f32 %v768, %v823
        %v857 = vsub.f32 %v770, %v823
        %v858 = vsub.f32 %v774, %v826
        %v859 = vsub.f32 %v776, %v826
        %v860 = vsub.f32 %v778, %v829
        %v861 = vsub.f32 %v780, %v829
        %v862 = vmul.f32 %v830, 1.442695
        %v863 = vpow.pop %v862
        %v864 = vmul.f32 %v831, 1.442695
        %v865 = vpow.pop %v864
        %v866 = vmul.f32 %v832, 1.442695
        %v867 = vpow.pop %v866
        %v868 = vmul.f32 %v833, 1.442695
        %v869 = vpow.pop %v868
        %v870 = vmul.f32 %v834, 1.442695
        %v871 = vpow.pop %v870
        %v872 = vmul.f32 %v835, 1.442695
        %v873 = vpow.pop %v872
        %v874 = vmul.f32 %v836, 1.442695
        %v875 = vpow.pop %v874
        %v876 = vmul.f32 %v837, 1.442695
        %v877 = vpow.pop %v876
        %v878 = vmul.f32 %v838, 1.442695
        %v879 = vpow.pop %v878
        %v880 = vmul.f32 %v839, 1.442695
        %v881 = vpow.pop %v880
        %v882 = vmul.f32 %v840, 1.442695
        %v883 = vpow.pop %v882
        %v884 = vmul.f32 %v841, 1.442695
        %v885 = vpow.pop %v884
        %v886 = vmul.f32 %v842, 1.442695
        %v887 = vpow.pop %v886
        %v888 = vmul.f32 %v843, 1.442695
        %v889 = vpow.pop %v888
        %v890 = vmul.f32 %v844, 1.442695
        %v891 = vpow.pop %v890
        %v892 = vmul.f32 %v845, 1.442695
        %v893 = vpow.pop %v892
        %v894 = vmul.f32 %v846, 1.442695
        %v895 = vpow.pop %v894
        %v896 = vmul.f32 %v847, 1.442695
        %v897 = vpow.pop %v896
        %v898 = vmul.f32 %v848, 1.442695
        %v899 = vpow.pop %v898
        %v900 = vmul.f32 %v849, 1.442695
        %v901 = vpow.pop %v900
        %v902 = vmul.f32 %v850, 1.442695
        %v903 = vpow.pop %v902
        %v904 = vmul.f32 %v851, 1.442695
        %v905 = vpow.pop %v904
        %v906 = vmul.f32 %v852, 1.442695
        %v907 = vpow.pop %v906
        %v908 = vmul.f32 %v853, 1.442695
        %v909 = vpow.pop %v908
        %v910 = vmul.f32 %v854, 1.442695
        %v911 = vpow.pop %v910
        %v912 = vmul.f32 %v855, 1.442695
        %v913 = vpow.pop %v912
        %v914 = vmul.f32 %v856, 1.442695
        %v915 = vpow.pop %v914
        %v916 = vmul.f32 %v857, 1.442695
        %v917 = vpow.pop %v916
        %v918 = vmul.f32 %v858, 1.442695
        %v919 = vpow.pop %v918
        %v920 = vmul.f32 %v859, 1.442695
        %v921 = vpow.pop %v920
        %v922 = vmul.f32 %v860, 1.442695
        %v923 = vpow.pop %v922
        %v924 = vmul.f32 %v861, 1.442695
        %v925 = vpow.pop %v924
        %v926 = vadd.f32 %v863, %v865
        %927 = vadd.xlane.f32.xlu0 %v926
        %v928 = vpop.xlane.xlu0 %927
        %v929 = vadd.f32 %v867, %v869
        %930 = vadd.xlane.f32.xlu0 %v929
        %v931 = vpop.xlane.xlu0 %930
        %v932 = vadd.f32 %v871, %v873
        %933 = vadd.xlane.f32.xlu0 %v932
        %v934 = vpop.xlane.xlu0 %933
        %v935 = vadd.f32 %v875, %v877
        %936 = vadd.xlane.f32.xlu0 %v935
        %v937 = vpop.xlane.xlu0 %936
        %v938 = vadd.f32 %v879, %v881
        %939 = vadd.xlane.f32.xlu0 %v938
        %v940 = vpop.xlane.xlu0 %939
        %v941 = vadd.f32 %v883, %v885
        %942 = vadd.xlane.f32.xlu0 %v941
        %v943 = vpop.xlane.xlu0 %942
        %v944 = vadd.f32 %v887, %v889
        %945 = vadd.xlane.f32.xlu0 %v944
        %v946 = vpop.xlane.xlu0 %945
        %v947 = vadd.f32 %v891, %v893
        %948 = vadd.xlane.f32.xlu0 %v947
        %v949 = vpop.xlane.xlu0 %948
        %v950 = vadd.f32 %v895, %v897
        %951 = vadd.xlane.f32.xlu0 %v950
        %v952 = vpop.xlane.xlu0 %951
        %v953 = vadd.f32 %v899, %v901
        %954 = vadd.xlane.f32.xlu0 %v953
        %v955 = vpop.xlane.xlu0 %954
        %v956 = vadd.f32 %v903, %v905
        %957 = vadd.xlane.f32.xlu0 %v956
        %v958 = vpop.xlane.xlu0 %957
        %v959 = vadd.f32 %v907, %v909
        %960 = vadd.xlane.f32.xlu0 %v959
        %v961 = vpop.xlane.xlu0 %960
        %v962 = vadd.f32 %v911, %v913
        %963 = vadd.xlane.f32.xlu0 %v962
        %v964 = vpop.xlane.xlu0 %963
        %v965 = vadd.f32 %v915, %v917
        %966 = vadd.xlane.f32.xlu0 %v965
        %v967 = vpop.xlane.xlu0 %966
        %v968 = vadd.f32 %v919, %v921
        %969 = vadd.xlane.f32.xlu0 %v968
        %v970 = vpop.xlane.xlu0 %969
        %v971 = vadd.f32 %v923, %v925
        %972 = vadd.xlane.f32.xlu0 %v971
        %v973 = vpop.xlane.xlu0 %972
        %v974 = vrcp.pop %v928
        %v975 = vrcp.pop %v931
        %v976 = vrcp.pop %v934
        %v977 = vrcp.pop %v937
        %v978 = vrcp.pop %v940
        %v979 = vrcp.pop %v943
        %v980 = vrcp.pop %v946
        %v981 = vrcp.pop %v949
        %v982 = vrcp.pop %v952
        %v983 = vrcp.pop %v955
        %v984 = vrcp.pop %v958
        %v985 = vrcp.pop %v961
        %v986 = vrcp.pop %v964
        %v987 = vrcp.pop %v967
        %v988 = vrcp.pop %v970
        %v989 = vrcp.pop %v973
        %v990 = vmul.f32 %v863, %v974
        %v991 = vmul.f32 %v865, %v974
        %v992 = vmul.f32 %v867, %v975
        %v993 = vmul.f32 %v869, %v975
        %v994 = vmul.f32 %v871, %v976
        %v995 = vmul.f32 %v873, %v976
        %v996 = vmul.f32 %v875, %v977
        %v997 = vmul.f32 %v877, %v977
        %v998 = vmul.f32 %v879, %v978
        %v999 = vmul.f32 %v881, %v978
        %v1000 = vmul.f32 %v883, %v979
        %v1001 = vmul.f32 %v885, %v979
        %v1002 = vmul.f32 %v887, %v980
        %v1003 = vmul.f32 %v889, %v980
        %v1004 = vmul.f32 %v891, %v981
        %v1005 = vmul.f32 %v893, %v981
        %v1006 = vmul.f32 %v895, %v982
        %v1007 = vmul.f32 %v897, %v982
        %v1008 = vmul.f32 %v899, %v983
        %v1009 = vmul.f32 %v901, %v983
        %v1010 = vmul.f32 %v903, %v984
        %v1011 = vmul.f32 %v905, %v984
        %v1012 = vmul.f32 %v907, %v985
        %v1013 = vmul.f32 %v909, %v985
        %v1014 = vmul.f32 %v911, %v986
        %v1015 = vmul.f32 %v913, %v986
        %v1016 = vmul.f32 %v915, %v987
        %v1017 = vmul.f32 %v917, %v987
        %v1018 = vmul.f32 %v919, %v988
        %v1019 = vmul.f32 %v921, %v988
        %v1020 = vmul.f32 %v923, %v989
        %v1021 = vmul.f32 %v925, %v989
        %v1022 = vld [vmem:[#allocation3] sm:$0xff]
        %v1023 = vld [vmem:[#allocation3 + $0x8] sm:$0xff]
        %v1024 = vpack.c.bf16 %v992, %v990
        %v1025 = vpack.c.bf16 %v993, %v991
        %v1026 = vpack.c.bf16 %v996, %v994
        %v1027 = vpack.c.bf16 %v997, %v995
        %v1028 = vpack.c.bf16 %v1000, %v998
        %v1029 = vpack.c.bf16 %v1001, %v999
        %v1030 = vpack.c.bf16 %v1004, %v1002
        %v1031 = vpack.c.bf16 %v1005, %v1003
        %v1032 = vpack.c.bf16 %v1008, %v1006
        %v1033 = vpack.c.bf16 %v1009, %v1007
        %v1034 = vpack.c.bf16 %v1012, %v1010
        %v1035 = vpack.c.bf16 %v1013, %v1011
        %v1036 = vpack.c.bf16 %v1016, %v1014
        %v1037 = vpack.c.bf16 %v1017, %v1015
        %v1038 = vpack.c.bf16 %v1020, %v1018
        %v1039 = vpack.c.bf16 %v1021, %v1019
        %1040 = vmatprep.subr.bf16.mxu0 %v1025
        %1041 = vmatpush1.bf16.xpose.msra.mxu0 %v1024
        %1042 = vmatprep.subr.bf16.mxu0 %v1027
        %1043 = vmatpush1.bf16.xpose.msra.mxu0 %v1026
        %1044 = vmatprep.subr.bf16.mxu0 %v1029
        %1045 = vmatpush1.bf16.xpose.msra.mxu0 %v1028
        %1046 = vmatprep.subr.bf16.mxu0 %v1031
        %1047 = vmatpush1.bf16.xpose.msra.mxu0 %v1030
        %1048 = vmatprep.subr.bf16.mxu0 %v1033
        %1049 = vmatpush1.bf16.xpose.msra.mxu0 %v1032
        %1050 = vmatprep.subr.bf16.mxu0 %v1035
        %1051 = vmatpush1.bf16.xpose.msra.mxu0 %v1034
        %1052 = vmatprep.subr.bf16.mxu0 %v1037
        %1053 = vmatpush1.bf16.xpose.msra.mxu0 %v1036
        %1054 = vmatprep.subr.bf16.mxu0 %v1039
        %1055 = vmatpush1.bf16.xpose.msra.mxu0 %v1038
        %1056 = vmatprep.subr.bf16.mxu0 0
        %1057 = vmatpush1.bf16.xpose.msra.mxu0 0
        %1058 = vmatprep.subr.bf16.mxu0 0
        %1059 = vmatpush1.bf16.xpose.msra.mxu0 0
        %1060 = vmatprep.subr.bf16.mxu0 0
        %1061 = vmatpush1.bf16.xpose.msra.mxu0 0
        %1062 = vmatprep.subr.bf16.mxu0 0
        %1063 = vmatpush1.bf16.xpose.msra.mxu0 0
        %1064 = vmatprep.subr.bf16.mxu0 0
        %1065 = vmatpush1.bf16.xpose.msra.mxu0 0
        %1066 = vmatprep.subr.bf16.mxu0 0
        %1067 = vmatpush1.bf16.xpose.msra.mxu0 0
        %1068 = vmatprep.subr.bf16.mxu0 0
        %1069 = vmatpush1.bf16.xpose.msra.mxu0 0
        %1070 = vmatprep.subr.bf16.mxu0 0
        %1071 = vmatpush1.bf16.xpose.msra.mxu0 0
        %1072 = vmatprep.mubr.bf16.mxu0 %v1023
        %1073 = vmatmul.mubr.bf16.gmra.mrb[0].mxu0 %v1022
        %v1074 = vpop.f32.mrb[0].mxu0
        %v1075 = vadd.f32 0.0, %v1074
        %v1076 = vpop.f32.mrb[0].mxu0
        %v1077 = vpop.f32.mrb[0].mxu0
        %v1078 = vadd.f32 0.0, %v1077
        %v1079 = vpop.f32.mrb[0].mxu0
        %1080 = vdwg.mxu0
        %s1081 = sld [smem:[#allocation4]]
        %v1082 = vstv %s1081
        %v1083 = vmul.f32 %v1082, %v1075
        %v1084 = vmul.f32 %v1082, %v1078
        %v1085 = vadd.f32 %v1083, %v559
        %v1086 = vadd.f32 %v1084, %v560
        %1087 = vst [vmem:[%s408] sm:$0xff] %v1085
        %1088 = vst [vmem:[%s408 + $0x8] sm:$0xff] %v1086
        %s1089 = sand.u32 %s253, 1
        %s1090 = scalar_lea.sflag [#allocation7], %s1089
        %s1091 = sand.u32 %s253, 1
        %s1092 = smul.addr %s1091, 16
        %s1093 = scalar_lea.vmem [#allocation10], %s1092
        // Predicated region
        $region69: #{tpu_custom_call.1} parent=55 // pred_check
          %p1094 = pneg %p263
        $region70: #{tpu_custom_call.1} parent=55 // pred_check_branch
          %1096 = sbr.rel (%p1094) target = $region72
        $region71: #{tpu_custom_call.1} parent=55 // pred_region
          %s1098 = ssub.s32 256, 256
          %1099 = vsyncadd %s1090, %s1098
          %s1100 = smul.addr %s34, 4
          %s1101 = sadd.s32 %s35, %s1100
          %s1102 = smul.addr %s1101, 128
          %s1103 = scalar_lea.hbm %s9, %s1102
          %s1104 = sshll.u32 %s1093, 4
          %s1105 = int_to_ptr.vmem [resolvable:$true] %s1104
          %1110 = dma.vmem_to_hbm [thread:$0]  %s1105, 256, %s1103, %s1090, 128, 256, 8
        $region72: #{tpu_custom_call.1} parent=55 // pred_fallthru
          _
      $region56: #{tpu_custom_call.1} parent=5 // pred_fallthru
        _
      %p1111 = scmp.le.s32.totalorder 2, %s25
      // Predicated region
      $region73: #{tpu_custom_call.1} parent=5 // pred_check
        %p1112 = pneg %p1111
      $region74: #{tpu_custom_call.1} parent=5 // pred_check_branch
        %1114 = sbr.rel (%p1112) target = $region76
      $region75: #{tpu_custom_call.1} parent=5 // pred_region
        %s1115 = ssub.s32 %s25, 2
        // Predicated region
        $region77: #{tpu_custom_call.1} parent=75 // pred_check
          %p1116 = pneg %p269
        $region78: #{tpu_custom_call.1} parent=75 // pred_check_branch
          %1118 = sbr.rel (%p1116) target = $region80
        $region79: #{tpu_custom_call.1} parent=75 // pred_region
          %s1119 = sand.u32 %s254, 1
          %s1120 = scalar_lea.sflag [#allocation7], %s1119
          %s1121 = sand.u32 %s254, 1
          %s1122 = smul.addr %s1121, 16
          %s1123 = scalar_lea.vmem [#allocation10], %s1122
          %1124 = dma.done %s1120, 256
        $region80: #{tpu_custom_call.1} parent=75 // pred_fallthru
          _
      $region76: #{tpu_custom_call.1} parent=5 // pred_fallthru
        _
    $region6: #{tpu_custom_call.1} parent=1 // loop_footer
      %s29 = sadd.s32 1, %s25
    $region7: #{tpu_custom_call.1} parent=1 // loop_footer_branch
      %24 = sbr.rel target = $region3
    $region8: #{tpu_custom_call.1} parent=1 // loop_exit
      _
    %1125 = vsyncpa [#allocation6], 1
    %s1126 = scalar_lea.sflag [#allocation6], 1
    %1127 = vsyncpa %s1126, 1
    %1128 = vsyncpa [#allocation9], 1
    %s1129 = scalar_lea.sflag [#allocation9], 1
    %1130 = vsyncpa %s1129, 1
    %1131 = vsyncpa [#allocation7], 1
    %s1132 = scalar_lea.sflag [#allocation7], 1
    %1133 = vsyncpa %s1132, 1

</llo_original>
